<compile_context>
chip_gen: v6e
topology: v6e:2x2x1
jax: 0.10.0
libtpu: 0.0.40
codegen_flags: <defaults>
</compile_context>

<pallas_src>
import functools

import jax
import jax.numpy as jnp
from jax.experimental import pallas as pl
from jax.experimental.pallas import tpu as pltpu

EPS = 1e-6


# ----------------------------------------------------------------------------
# Small utilities
# ----------------------------------------------------------------------------
def _round_up(v, m):
    return ((v + m - 1) // m) * m


def _round_down(v, m):
    return (v // m) * m


def _sublane_multiple(dtype):
    # sublane packing: 8 rows for 32-bit, 16 for 16-bit, 32 for 8-bit dtypes
    return {4: 8, 2: 16, 1: 32}.get(jnp.dtype(dtype).itemsize, 8)


@functools.lru_cache(maxsize=1)
def _vmem_capacity_bytes():
    try:
        info = pltpu.get_tpu_info()
        cap = int(getattr(info, "vmem_capacity_bytes", 0) or 0)
        if cap >= 16 * 1024 * 1024:
            return cap
    except Exception:
        pass
    return 64 * 1024 * 1024  # conservative default: v7x has 64 MiB per TensorCore


def _vmem_budget():
    return int(_vmem_capacity_bytes() * 0.65)


def _compiler_params(dimension_semantics):
    return pltpu.CompilerParams(
        dimension_semantics=dimension_semantics,
        vmem_limit_bytes=_vmem_budget(),
    )


def _choose_channel_tile(C, bytes_per_channel, budget, step, prefer_split):
    """Largest `step`-aligned channel tile whose block fits `budget`.

    tc == C (full axis) is always legal regardless of alignment.  When the
    whole C fits and `prefer_split` is set, split into >= 2 aligned tiles so
    both v7x TensorCores get a 'parallel' grid step.
    """
    if C <= step:
        return C
    max_fit = budget // max(1, bytes_per_channel)
    if max_fit >= C:
        if prefer_split and C >= 2 * step:
            return max(step, _round_down((C + 1) // 2, step))
        return C
    return max(step, min(_round_down(max_fit, step), _round_down(C, step)))


def _choose_hw_tile(HW, rows, budget):
    """Largest 128-aligned tile of the flattened spatial axis fitting `budget`."""
    if rows * _round_up(HW, 128) * 4 <= budget:
        return HW
    thw = max(128, _round_down(budget // max(1, rows * 4), 128))
    return min(thw, HW) if HW >= 128 else HW


# ----------------------------------------------------------------------------
# Kernels
# ----------------------------------------------------------------------------
def _fused_kernel(mix_ref, x_ref, o_ref, *, hw, eps):
    """Single-read MixStyle block: stats + cross-batch style mix + affine.

    mix_ref : (B, B, 1, 1) f32,  M[b, b'] = lmda[b]*[b==b'] + (1-lmda[b])*[b'==perm[b]]
    x_ref   : (B, tc, HW)        full batch, channel tile, full flattened spatial
    o_ref   : (B, tc, HW)
    """
    x = x_ref[...].astype(jnp.float32)
    inv_n = 1.0 / float(hw)
    # torch unbiased variance (NaN for a single spatial element, like torch)
    corr = float(hw) / float(hw - 1) if hw > 1 else float("nan")
    mu = jnp.sum(x, axis=-1, keepdims=True) * inv_n                 # (B, tc, 1)
    ex2 = jnp.sum(x * x, axis=-1, keepdims=True) * inv_n            # (B, tc, 1)
    var = jnp.maximum((ex2 - mu * mu) * corr, 0.0)
    sig = jnp.sqrt(var + eps)                                       # (B, tc, 1)

    m = mix_ref[...]                                                # (B, B, 1, 1)
    # stat_mix[b] = sum_{b'} M[b, b'] * stat[b']   (batch axis is small/untiled)
    mu_mix = jnp.sum(m * mu, axis=1)                                # (B, tc, 1)
    sig_mix = jnp.sum(m * sig, axis=1)                              # (B, tc, 1)

    scale = sig_mix / sig
    shift = mu_mix - mu * scale
    o_ref[...] = (x * scale + shift).astype(o_ref.dtype)


def _stats_kernel(x_ref, mu_ref, sig_ref, sum_ref, sq_ref, *, hw, thw, eps, mask_tail):
    """Per-(batch, channel) mean / std, accumulated over spatial tiles.

    x_ref   : (B, tc, thw)   spatial tile of x
    mu_ref  : (B, tc, 1)     f32 outputs, written on the last spatial step
    sig_ref : (B, tc, 1)
    sum_ref / sq_ref : (B, tc, 1) f32 VMEM scratch accumulators
    """
    k = pl.program_id(1)

    @pl.when(k == 0)
    def _init():
        sum_ref[...] = jnp.zeros_like(sum_ref)
        sq_ref[...] = jnp.zeros_like(sq_ref)

    x = x_ref[...].astype(jnp.float32)
    if mask_tail:  # static: the last spatial tile is partial -> zero the tail lanes
        lane = jax.lax.broadcasted_iota(jnp.int32, x.shape, 2)
        x = jnp.where(k * thw + lane < hw, x, 0.0)
    sum_ref[...] += jnp.sum(x, axis=-1, keepdims=True)
    sq_ref[...] += jnp.sum(x * x, axis=-1, keepdims=True)

    @pl.when(k == pl.num_programs(1) - 1)
    def _finalize():
        inv_n = 1.0 / float(hw)
        corr = float(hw) / float(hw - 1) if hw > 1 else float("nan")
        mu = sum_ref[...] * inv_n
        var = jnp.maximum((sq_ref[...] * inv_n - mu * mu) * corr, 0.0)
        mu_ref[...] = mu
        sig_ref[...] = jnp.sqrt(var + eps)


def _apply_kernel(x_ref, scale_ref, shift_ref, o_ref):
    """out = x * scale + shift (per-(batch, channel) affine broadcast over lanes)."""
    x = x_ref[...].astype(jnp.float32)
    o_ref[...] = (x * scale_ref[...] + shift_ref[...]).astype(o_ref.dtype)


# ----------------------------------------------------------------------------
# pallas_call wrappers
# ----------------------------------------------------------------------------
def _fused_mix(x3, mix4, tc, donate_x):
    B, C, HW = x3.shape
    return pl.pallas_call(
        functools.partial(_fused_kernel, hw=HW, eps=EPS),
        out_shape=jax.ShapeDtypeStruct((B, C, HW), x3.dtype),
        grid=(pl.cdiv(C, tc),),
        in_specs=[
            pl.BlockSpec((B, B, 1, 1), lambda j: (0, 0, 0, 0)),
            pl.BlockSpec((B, tc, HW), lambda j: (0, j, 0)),
        ],
        out_specs=pl.BlockSpec((B, tc, HW), lambda j: (0, j, 0)),
        compiler_params=_compiler_params(("parallel",)),
        input_output_aliases=({1: 0} if donate_x else {}),
    )(mix4, x3)


def _compute_stats(x3, tc, thw):
    B, C, HW = x3.shape
    gc, gk = pl.cdiv(C, tc), pl.cdiv(HW, thw)
    mu, sig = pl.pallas_call(
        functools.partial(
            _stats_kernel, hw=HW, thw=thw, eps=EPS,
            mask_tail=(gk > 1 and HW % thw != 0),
        ),
        out_shape=(
            jax.ShapeDtypeStruct((B, C, 1), jnp.float32),
            jax.ShapeDtypeStruct((B, C, 1), jnp.float32),
        ),
        grid=(gc, gk),
        in_specs=[pl.BlockSpec((B, tc, thw), lambda j, k: (0, j, k))],
        out_specs=(
            pl.BlockSpec((B, tc, 1), lambda j, k: (0, j, 0)),
            pl.BlockSpec((B, tc, 1), lambda j, k: (0, j, 0)),
        ),
        scratch_shapes=[
            pltpu.VMEM((B, tc, 1), jnp.float32),
            pltpu.VMEM((B, tc, 1), jnp.float32),
        ],
        compiler_params=_compiler_params(("parallel", "arbitrary")),
    )(x3)
    return mu, sig


def _apply_affine(x3, scale, shift, tc, thw, donate_x):
    B, C, HW = x3.shape
    gc, gk = pl.cdiv(C, tc), pl.cdiv(HW, thw)
    return pl.pallas_call(
        _apply_kernel,
        out_shape=jax.ShapeDtypeStruct((B, C, HW), x3.dtype),
        grid=(gc, gk),
        in_specs=[
            pl.BlockSpec((B, tc, thw), lambda j, k: (0, j, k)),
            pl.BlockSpec((B, tc, 1), lambda j, k: (0, j, 0)),
            pl.BlockSpec((B, tc, 1), lambda j, k: (0, j, 0)),
        ],
        out_specs=pl.BlockSpec((B, tc, thw), lambda j, k: (0, j, k)),
        compiler_params=_compiler_params(("parallel", "parallel")),
        input_output_aliases=({0: 0} if donate_x else {}),
    )(x3, scale, shift)


# ----------------------------------------------------------------------------
# Dispatch
# ----------------------------------------------------------------------------
def mixstyle_mix(x, perm, lmda, *, donate_x=False, tiling_budget_bytes=None):
    """Normalize + style-mix (MixStyle). x: (B, C, H, W) NCHW.

    `tiling_budget_bytes` only overrides the tile-selection budget (used by the
    tests to force the two-pass / tiled paths); the compiler VMEM limit always
    uses the real per-generation budget.
    """
    B, C, H, W = x.shape
    HW = H * W
    x3 = x.reshape(B, C, HW)
    pad_hw = _round_up(HW, 128)                       # lane padding of the spatial axis
    sub = _sublane_multiple(x.dtype)                  # 8 f32 / 16 bf16 / 32 int8
    budget = int(tiling_budget_bytes) if tiling_budget_bytes else _vmem_budget()
    prefer_split = (B * C * pad_hw * 4) >= (2 << 20)  # keep >= 2 parallel steps (v7x)

    # Tiny XLA glue: fold lambda + crossdomain permutation into one (B, B) matrix,
    #   M = diag(lmda) + diag(1 - lmda) @ P,  so that  stat_mix = M @ stat.
    lam = lmda.astype(jnp.float32).reshape(B, 1)
    eye = jnp.eye(B, dtype=jnp.float32)
    mix = lam * eye + (1.0 - lam) * eye[perm]         # (B, B)

    # ---- fused single-read path: x streamed from HBM exactly once ----------
    fused_budget = budget // 6                        # in + out double-buffered + f32 temps
    fused_bpc = B * (pad_hw + B) * 4                  # per-channel bytes incl. mixing temp
    tc_f = _choose_channel_tile(C, fused_bpc, fused_budget, sub, prefer_split)
    if tc_f * fused_bpc <= fused_budget:
        out = _fused_mix(x3, mix.reshape(B, B, 1, 1), tc_f, donate_x)
        return out.reshape(B, C, H, W)

    # ---- two-pass path (stats reduce, then per-channel affine) -------------
    stats_budget = budget // 3                        # one double-buffered stream + f32 temp
    apply_budget = budget // 6                        # in + out streams + f32 temp
    bpc = B * pad_hw * 4
    tc_s = _choose_channel_tile(C, bpc, stats_budget, sub, prefer_split)
    thw_s = _choose_hw_tile(HW, B * tc_s, stats_budget)
    tc_a = _choose_channel_tile(C, bpc, apply_budget, sub, prefer_split)
    thw_a = _choose_hw_tile(HW, B * tc_a, apply_budget)

    mu3, sig3 = _compute_stats(x3, tc_s, thw_s)       # (B, C, 1) f32 each
    mu, sig = mu3[..., 0], sig3[..., 0]               # (B, C) -- tiny XLA glue
    mu_mix = mix @ mu
    sig_mix = mix @ sig
    scale = sig_mix / sig
    shift = mu_mix - mu * scale
    out = _apply_affine(x3, scale[..., None], shift[..., None], tc_a, thw_a, donate_x)
    return out.reshape(B, C, H, W)


# ----------------------------------------------------------------------------
# Host-side randomness glue + full forward
# ----------------------------------------------------------------------------
def sample_mixstyle_randomness(key, B, alpha=5.0, alpha2=2.0):
    """Beta(5,2) lambdas + crossdomain permutation (host-side glue)."""
    k_beta, k_pb, k_pa = jax.random.split(key, 3)
    lmda = jax.random.beta(k_beta, alpha, alpha2, (B,), dtype=jnp.float32)

    # crossdomain: reverse, then shuffle each half independently.  torch.chunk(2)
    # gives the first chunk the ceil half, so mirror that split (odd-B safe).
    perm = jnp.arange(B - 1, -1, -1, dtype=jnp.int32)
    half = (B + 1) // 2
    perm_b = perm[:half][jax.random.permutation(k_pb, half)]
    perm_a = perm[half:][jax.random.permutation(k_pa, B - half)]
    perm = jnp.concatenate([perm_b, perm_a], axis=0)
    return perm, lmda


def mixstyle_forward(x, labels, key, training=True, activated=True):
    """MixStyle_Cls.forward equivalent (crossdomain branch)."""
    del labels  # labels are only used by the 'sourcedomain' branch
    if not training or not activated:
        return x
    B = x.shape[0]
    perm, lmda = sample_mixstyle_randomness(key, B)
    return mixstyle_mix(x, perm, lmda)


# ----------------------------------------------------------------------------
# Pure-JAX reference + tests
# ----------------------------------------------------------------------------
def _reference(x, perm, lmda):
    mu = x.mean(axis=(2, 3), keepdims=True)
    var = x.var(axis=(2, 3), keepdims=True, ddof=1)   # torch default: unbiased
    sig = jnp.sqrt(var + EPS)
    x_normed = (x - mu) / sig
    l = lmda.reshape(-1, 1, 1, 1).astype(x.dtype)
    mu2, sig2 = mu[perm], sig[perm]
    mu_mix = mu * l + mu2 * (1.0 - l)
    sig_mix = sig * l + sig2 * (1.0 - l)
    return x_normed * sig_mix + mu_mix


if __name__ == "__main__":
    key = jax.random.PRNGKey(0)
    k_x1, k_r1, k_x2, k_r2, k_x3, k_r3 = jax.random.split(key, 6)

    # --- Test 1: module-scale input (B=2, C=4, 16x16) -> fused single-read kernel
    x1 = jax.random.normal(k_x1, (2, 4, 16, 16), dtype=jnp.float32)
    labels = jnp.array([0, 1], dtype=jnp.int32)       # unused by crossdomain mix
    perm1, lmda1 = sample_mixstyle_randomness(k_r1, 2)
    out1 = jax.block_until_ready(mixstyle_mix(x1, perm1, lmda1))
    ref1 = _reference(x1, perm1, lmda1)
    assert out1.shape == x1.shape and out1.dtype == x1.dtype
    assert jnp.allclose(out1, ref1, atol=1e-4, rtol=1e-4), "fused path mismatch"

    # --- Test 2: odd batch + forced two-pass path with channel/HW-tiled grids
    x2 = jax.random.normal(k_x2, (3, 256, 8, 24), dtype=jnp.float32)
    perm2, lmda2 = sample_mixstyle_randomness(k_r2, 3)
    out2 = jax.block_until_ready(
        mixstyle_mix(x2, perm2, lmda2, tiling_budget_bytes=96 * 1024))
    ref2 = _reference(x2, perm2, lmda2)
    assert out2.shape == x2.shape and out2.dtype == x2.dtype
    assert jnp.allclose(out2, ref2, atol=1e-3, rtol=1e-3), "two-pass path mismatch"

    # --- Test 3: bf16 input through the fused path
    x3 = jax.random.normal(k_x3, (4, 8, 8, 8), dtype=jnp.bfloat16)
    perm3, lmda3 = sample_mixstyle_randomness(k_r3, 4)
    out3 = jax.block_until_ready(mixstyle_mix(x3, perm3, lmda3))
    ref3 = _reference(x3.astype(jnp.float32), perm3, lmda3)
    assert out3.dtype == jnp.bfloat16
    assert jnp.allclose(out3.astype(jnp.float32), ref3, atol=7.5e-2, rtol=7.5e-2), \
        "bf16 fused path mismatch"

    # Full forward wrapper (training + activated) once.
    _ = jax.block_until_ready(mixstyle_forward(x1, labels, k_r1))

    print("KERNEL_OK")
</pallas_src>

<mosaic_0001>
module attributes {stable_mosaic.version = 11 : i64} {
  func.func @_fused_kernel(%arg0: i32, %arg1: memref<2x2x1x1xf32, #tpu.memory_space<vmem>>, %arg2: memref<2x4x256xf32, #tpu.memory_space<vmem>>, %arg3: memref<2x4x256xf32, #tpu.memory_space<vmem>>) attributes {dimension_semantics = [#tpu.dimension_semantics<parallel>], iteration_bounds = array<i64: 1>, scalar_prefetch = 0 : i64, scratch_operands = 0 : i64, tpu.core_type = #tpu.core_type<tc>, window_params = [{pipeline_mode = #tpu.pipeline_mode<synchronous>, transform_indices = @transform_0, window_bounds = array<i64: 2, 2, 1, 1>}, {transform_indices = @transform_1, window_bounds = array<i64: 2, 4, 256>}, {transform_indices = @transform_2, window_bounds = array<i64: 2, 4, 256>}]} {
    %c0 = arith.constant 0 : index
    %c0_0 = arith.constant 0 : index
    %c0_1 = arith.constant 0 : index
    %0 = vector.load %arg2[%c0, %c0_0, %c0_1] : memref<2x4x256xf32, #tpu.memory_space<vmem>>, vector<2x4x256xf32>
    %cst = arith.constant dense<0.000000e+00> : vector<2x4xf32>
    %1 = vector.multi_reduction <add>, %0, %cst [2] : vector<2x4x256xf32> to vector<2x4xf32>
    %2 = vector.shape_cast %1 : vector<2x4xf32> to vector<2x4x1xf32>
    %cst_2 = arith.constant 3.906250e-03 : f32
    %3 = vector.broadcast %cst_2 : f32 to vector<2x4x1xf32>
    %4 = arith.mulf %2, %3 : vector<2x4x1xf32>
    %5 = arith.mulf %0, %0 : vector<2x4x256xf32>
    %cst_3 = arith.constant dense<0.000000e+00> : vector<2x4xf32>
    %6 = vector.multi_reduction <add>, %5, %cst_3 [2] : vector<2x4x256xf32> to vector<2x4xf32>
    %7 = vector.shape_cast %6 : vector<2x4xf32> to vector<2x4x1xf32>
    %cst_4 = arith.constant 3.906250e-03 : f32
    %8 = vector.broadcast %cst_4 : f32 to vector<2x4x1xf32>
    %9 = arith.mulf %7, %8 : vector<2x4x1xf32>
    %10 = arith.mulf %4, %4 : vector<2x4x1xf32>
    %11 = arith.subf %9, %10 : vector<2x4x1xf32>
    %cst_5 = arith.constant 1.00392163 : f32
    %12 = vector.broadcast %cst_5 : f32 to vector<2x4x1xf32>
    %13 = arith.mulf %11, %12 : vector<2x4x1xf32>
    %cst_6 = arith.constant 0.000000e+00 : f32
    %14 = vector.broadcast %cst_6 : f32 to vector<2x4x1xf32>
    %15 = arith.maximumf %13, %14 : vector<2x4x1xf32>
    %cst_7 = arith.constant 9.99999997E-7 : f32
    %16 = vector.broadcast %cst_7 : f32 to vector<2x4x1xf32>
    %17 = arith.addf %15, %16 : vector<2x4x1xf32>
    %18 = math.sqrt %17 : vector<2x4x1xf32>
    %c0_8 = arith.constant 0 : index
    %c0_9 = arith.constant 0 : index
    %c0_10 = arith.constant 0 : index
    %c0_11 = arith.constant 0 : index
    %19 = vector.load %arg1[%c0_8, %c0_9, %c0_10, %c0_11] : memref<2x2x1x1xf32, #tpu.memory_space<vmem>>, vector<2x2x1x1xf32>
    %20 = vector.shape_cast %4 : vector<2x4x1xf32> to vector<1x2x4x1xf32>
    %21 = vector.broadcast %19 : vector<2x2x1x1xf32> to vector<2x2x4x1xf32>
    %22 = vector.broadcast %20 : vector<1x2x4x1xf32> to vector<2x2x4x1xf32>
    %23 = arith.mulf %21, %22 : vector<2x2x4x1xf32>
    %cst_12 = arith.constant dense<0.000000e+00> : vector<2x4x1xf32>
    %24 = vector.multi_reduction <add>, %23, %cst_12 [1] : vector<2x2x4x1xf32> to vector<2x4x1xf32>
    %25 = vector.shape_cast %18 : vector<2x4x1xf32> to vector<1x2x4x1xf32>
    %26 = vector.broadcast %19 : vector<2x2x1x1xf32> to vector<2x2x4x1xf32>
    %27 = vector.broadcast %25 : vector<1x2x4x1xf32> to vector<2x2x4x1xf32>
    %28 = arith.mulf %26, %27 : vector<2x2x4x1xf32>
    %cst_13 = arith.constant dense<0.000000e+00> : vector<2x4x1xf32>
    %29 = vector.multi_reduction <add>, %28, %cst_13 [1] : vector<2x2x4x1xf32> to vector<2x4x1xf32>
    %30 = arith.divf %29, %18 : vector<2x4x1xf32>
    %31 = arith.mulf %4, %30 : vector<2x4x1xf32>
    %32 = arith.subf %24, %31 : vector<2x4x1xf32>
    %33 = vector.broadcast %30 : vector<2x4x1xf32> to vector<2x4x256xf32>
    %34 = arith.mulf %0, %33 : vector<2x4x256xf32>
    %35 = vector.broadcast %32 : vector<2x4x1xf32> to vector<2x4x256xf32>
    %36 = arith.addf %34, %35 : vector<2x4x256xf32>
    %c0_14 = arith.constant 0 : index
    %c0_15 = arith.constant 0 : index
    %c0_16 = arith.constant 0 : index
    %37 = vector.load %arg3[%c0_14, %c0_15, %c0_16] : memref<2x4x256xf32, #tpu.memory_space<vmem>>, vector<2x4x256xf32>
    tpu.vector_store %arg3[%c0_14, %c0_15, %c0_16], %36 {strides = array<i32>} : memref<2x4x256xf32, #tpu.memory_space<vmem>>, vector<2x4x256xf32>,
    return
  }
  func.func @transform_0(%arg0: i32) -> (i32, i32, i32, i32) {
    %c0_i32 = arith.constant 0 : i32
    %c0_i32_0 = arith.constant 0 : i32
    %c0_i32_1 = arith.constant 0 : i32
    %c0_i32_2 = arith.constant 0 : i32
    %c0_i32_3 = arith.constant 0 : i32
    return %c0_i32, %c0_i32_0, %c0_i32_1, %c0_i32_2 : i32, i32, i32, i32
  }
  func.func @transform_1(%arg0: i32) -> (i32, i32, i32) {
    %c0_i32 = arith.constant 0 : i32
    %c0_i32_0 = arith.constant 0 : i32
    %c0_i32_1 = arith.constant 0 : i32
    return %c0_i32, %arg0, %c0_i32_0 : i32, i32, i32
  }
  func.func @transform_2(%arg0: i32) -> (i32, i32, i32) {
    %c0_i32 = arith.constant 0 : i32
    %c0_i32_0 = arith.constant 0 : i32
    %c0_i32_1 = arith.constant 0 : i32
    return %c0_i32, %arg0, %c0_i32_0 : i32, i32, i32
  }
}

</mosaic_0001>

<llo_original>
// kernel: tpu_custom_call.1
$region0: #{tpu_custom_call.1}
  #allocation0 [shape = 'u32[]', space=smem, size = 0x4, offset = 0x4, fixed_abs, tag = 'smem constant byte address 0x4 - core index']
  #allocation1 [shape = 'u32[144,128]{1,0:T(1,128)}', space=vmem, size = 0x12000, scoped, tag = 'internal scratch']
  %s0 = inlined_call_operand.vmem [shape: f32[2,2,1,1], index: 0, kind: input, shape index: {}]
  %s1 = inlined_call_operand.hbm [shape: f32[2,4,256], index: 1, kind: input, shape index: {}]
  %s2 = inlined_call_operand.hbm [shape: f32[2,4,256], index: 2, kind: output, shape index: {}]
  %s3 = sld [smem:[#allocation0]]
  $region22: #{tpu_custom_call.1} parent=0
    _
  %s5 = ssub.s32 1, %s3
  %s6 = scalar_select 0, %s5, %s3
  $region1: #{tpu_custom_call.1} parent=0
    #allocation2 [shape = 'u8[8192]{0}', space=vmem, size = 0x2000, scoped, tag = 'input window, operand 1, single buffered']
    #allocation3 [shape = 's32[1]{0}', space=sflag, size = 0x4, scoped, tag = 'scoped memory for tpu_custom_call.1']
    #allocation4 [shape = 's32[1]{0}', space=sflag, size = 0x4, scoped, tag = 'scoped memory for tpu_custom_call.1']
    #allocation5 [shape = 'u8[8192]{0}', space=vmem, size = 0x2000, scoped, tag = 'output window, operand 0, single buffered']
    %7 = vsyncpa [#allocation3], 0
    %8 = vsyncpa [#allocation4], 0
    // Predicated region
    $region2: #{tpu_custom_call.1} parent=1 // pred_check
      _
    $region3: #{tpu_custom_call.1} parent=1 // pred_check_branch
      %10 = sbr.rel (0) target = $region5
    $region4: #{tpu_custom_call.1} parent=1 // pred_region
      _
    $region5: #{tpu_custom_call.1} parent=1 // pred_fallthru
      _
    // Predicated region
    $region6: #{tpu_custom_call.1} parent=1 // pred_check
      _
    $region7: #{tpu_custom_call.1} parent=1 // pred_check_branch
      %12 = sbr.rel (0) target = $region9
    $region8: #{tpu_custom_call.1} parent=1 // pred_region
      %s14 = ssub.s32 256, 256
      %15 = vsyncadd [#allocation3], %s14
      %s16 = sshll.u32 [#allocation2], 4
      %s17 = int_to_ptr.vmem [resolvable:$true] %s16
      %22 = dma.hbm_to_vmem [thread:$0]  %s1, 256, %s17, [#allocation3], 128, 128, 8
    $region9: #{tpu_custom_call.1} parent=1 // pred_fallthru
      _
    // Predicated region
    $region10: #{tpu_custom_call.1} parent=1 // pred_check
      _
    $region11: #{tpu_custom_call.1} parent=1 // pred_check_branch
      %24 = sbr.rel (0) target = $region13
    $region12: #{tpu_custom_call.1} parent=1 // pred_region
      %25 = dma.done [#allocation3], 256
    $region13: #{tpu_custom_call.1} parent=1 // pred_fallthru
      _
    %v26 = vld [vmem:[#allocation2] sm:$0xff]
    %v27 = vld [vmem:[#allocation2 + $0x8] sm:$0xff]
    %v30 = vcombine.high %v26, %v26
    %v31 = vcombine.high %v27, %v27
    %vm34 = vcmask 1043456
    %v35 = vsel %vm34, %v26, 0.0
    %v36 = vsel %vm34, %v30, 0.0
    %v37 = vadd.f32 %v35, %v36
    %38 = vadd.xlane.f32.xlu0 %v37
    %v39 = vpop.xlane.xlu0 %38
    %v40 = vsel %vm34, %v27, 0.0
    %v41 = vsel %vm34, %v31, 0.0
    %v42 = vadd.f32 %v40, %v41
    %43 = vadd.xlane.f32.xlu0 %v42
    %v44 = vpop.xlane.xlu0 %43
    %v45 = vmul.f32 %v39, 0.00390625
    %v46 = vmul.f32 %v44, 0.00390625
    %v47 = vmul.f32 %v26, %v26
    %v48 = vmul.f32 %v27, %v27
    %v51 = vcombine.high %v47, %v47
    %v52 = vcombine.high %v48, %v48
    %v55 = vsel %vm34, %v47, 0.0
    %v56 = vsel %vm34, %v51, 0.0
    %v57 = vadd.f32 %v55, %v56
    %58 = vadd.xlane.f32.xlu0 %v57
    %v59 = vpop.xlane.xlu0 %58
    %v60 = vsel %vm34, %v48, 0.0
    %v61 = vsel %vm34, %v52, 0.0
    %v62 = vadd.f32 %v60, %v61
    %63 = vadd.xlane.f32.xlu0 %v62
    %v64 = vpop.xlane.xlu0 %63
    %v65 = vmul.f32 %v59, 0.00390625
    %v66 = vmul.f32 %v64, 0.00390625
    %v67 = vmul.f32 %v45, %v45
    %v68 = vmul.f32 %v46, %v46
    %v69 = vsub.f32 %v65, %v67
    %v70 = vsub.f32 %v66, %v68
    %v71 = vmul.f32 %v69, 1.0039216
    %v72 = vmul.f32 %v70, 1.0039216
    %v73 = vmax.f32 %v71, 0.0
    %v74 = vmax.f32 %v72, 0.0
    %v75 = vadd.f32 %v73, 1e-06
    %v76 = vadd.f32 %v74, 1e-06
    %v77 = vrsqrt.pop %v75
    %v78 = vmul.f32 %v75, %v77
    %vm79 = vcmp.eq.f32.partialorder %v75, inf
    %v80 = vsel %vm79, %v75, %v78
    %vm81 = vcmp.eq.f32.partialorder %v75, 0.0
    %v82 = vand.u32 %v75, 2147483648
    %v83 = vsel %vm81, %v82, %v80
    %v84 = vrsqrt.pop %v76
    %v85 = vmul.f32 %v76, %v84
    %vm86 = vcmp.eq.f32.partialorder %v76, inf
    %v87 = vsel %vm86, %v76, %v85
    %vm88 = vcmp.eq.f32.partialorder %v76, 0.0
    %v89 = vand.u32 %v76, 2147483648
    %v90 = vsel %vm88, %v89, %v87
    %v91 = vld [vmem:[%s0] sm:$0x1]
    %v92 = vld [vmem:[%s0 + $0x1] sm:$0x1]
    %v93 = vld [vmem:[%s0 + $0x2] sm:$0x1]
    %v94 = vld [vmem:[%s0 + $0x3] sm:$0x1]
    %v99 = vlaneseq
    %v100 = vshrl.u32 %v99, 7
    %v101 = vsub.s32 0, %v100
    %v102 = vrot.slane %v91, %v101
    %v103 = vlaneseq
    %v104 = vshrl.u32 %v103, 7
    %v105 = vsub.s32 0, %v104
    %v106 = vrot.slane %v92, %v105
    %v107 = vlaneseq
    %v108 = vshrl.u32 %v107, 7
    %v109 = vsub.s32 0, %v108
    %v110 = vrot.slane %v93, %v109
    %v111 = vlaneseq
    %v112 = vshrl.u32 %v111, 7
    %v113 = vsub.s32 0, %v112
    %v114 = vrot.slane %v94, %v113
    %v119 = vmul.f32 %v102, %v45
    %v120 = vmul.f32 %v106, %v46
    %v121 = vmul.f32 %v110, %v45
    %v122 = vmul.f32 %v114, %v46
    %vm123 = vcmask 3072
    %v124 = vsel %vm123, %v119, 0.0
    %v125 = vsel %vm123, %v120, 0.0
    %v126 = vadd.f32 %v124, %v125
    %v127 = vsel %vm123, %v121, 0.0
    %v128 = vsel %vm123, %v122, 0.0
    %v129 = vadd.f32 %v127, %v128
    %v130 = vmul.f32 %v102, %v83
    %v131 = vmul.f32 %v106, %v90
    %v132 = vmul.f32 %v110, %v83
    %v133 = vmul.f32 %v114, %v90
    %v134 = vsel %vm123, %v130, 0.0
    %v135 = vsel %vm123, %v131, 0.0
    %v136 = vadd.f32 %v134, %v135
    %v137 = vsel %vm123, %v132, 0.0
    %v138 = vsel %vm123, %v133, 0.0
    %v139 = vadd.f32 %v137, %v138
    %v140 = vrcp.pop %v83
    %v141 = vmul.f32 %v136, %v140
    %v142 = vrcp.pop %v90
    %v143 = vmul.f32 %v139, %v142
    %v144 = vmul.f32 %v45, %v141
    %v145 = vmul.f32 %v46, %v143
    %v146 = vsub.f32 %v126, %v144
    %v147 = vsub.f32 %v129, %v145
    %149 = vset.pattern.permute.xlu0 0
    %150 = vperm.xlu0 %149, %v141
    %v151 = vpop.permute.xlu0 %150
    %153 = vset.pattern.permute.xlu0 0
    %154 = vperm.xlu0 %153, %v143
    %v155 = vpop.permute.xlu0 %154
    %v157 = vunpack.c.l.s4 839922192
    %v158 = vunpack.c.0.s8 %v157
    %v159 = vlaneseq
    %v160 = vshrl.u32 %v159, 7
    %v161 = vsub.s32 %v158, %v160
    %v162 = vrot.slane %v151, %v161
    %v164 = vunpack.c.l.s4 839922192
    %v165 = vunpack.c.0.s8 %v164
    %v166 = vlaneseq
    %v167 = vshrl.u32 %v166, 7
    %v168 = vsub.s32 %v165, %v167
    %v169 = vrot.slane %v155, %v168
    %v172 = vmul.f32 %v26, %v162
    %v173 = vmul.f32 %v27, %v169
    %175 = vset.pattern.permute.xlu0 0
    %176 = vperm.xlu0 %175, %v146
    %v177 = vpop.permute.xlu0 %176
    %179 = vset.pattern.permute.xlu0 0
    %180 = vperm.xlu0 %179, %v147
    %v181 = vpop.permute.xlu0 %180
    %v183 = vunpack.c.l.s4 839922192
    %v184 = vunpack.c.0.s8 %v183
    %v185 = vlaneseq
    %v186 = vshrl.u32 %v185, 7
    %v187 = vsub.s32 %v184, %v186
    %v188 = vrot.slane %v177, %v187
    %v190 = vunpack.c.l.s4 839922192
    %v191 = vunpack.c.0.s8 %v190
    %v192 = vlaneseq
    %v193 = vshrl.u32 %v192, 7
    %v194 = vsub.s32 %v191, %v193
    %v195 = vrot.slane %v181, %v194
    %v198 = vadd.f32 %v172, %v188
    %v199 = vadd.f32 %v173, %v195
    %200 = vst [vmem:[#allocation5] sm:$0xff] %v198
    %201 = vst [vmem:[#allocation5 + $0x8] sm:$0xff] %v199
    // Predicated region
    $region14: #{tpu_custom_call.1} parent=1 // pred_check
      _
    $region15: #{tpu_custom_call.1} parent=1 // pred_check_branch
      %203 = sbr.rel (0) target = $region17
    $region16: #{tpu_custom_call.1} parent=1 // pred_region
      %s205 = ssub.s32 256, 256
      %206 = vsyncadd [#allocation4], %s205
      %s207 = sshll.u32 [#allocation5], 4
      %s208 = int_to_ptr.vmem [resolvable:$true] %s207
      %213 = dma.vmem_to_hbm [thread:$0]  %s208, 256, %s2, [#allocation4], 128, 128, 8
    $region17: #{tpu_custom_call.1} parent=1 // pred_fallthru
      _
    // Predicated region
    $region18: #{tpu_custom_call.1} parent=1 // pred_check
      _
    $region19: #{tpu_custom_call.1} parent=1 // pred_check_branch
      %215 = sbr.rel (0) target = $region21
    $region20: #{tpu_custom_call.1} parent=1 // pred_region
      %216 = dma.done [#allocation4], 256
    $region21: #{tpu_custom_call.1} parent=1 // pred_fallthru
      _
    %217 = vsyncpa [#allocation3], 1
    %218 = vsyncpa [#allocation4], 1

</llo_original>
